<compile_context>
chip_gen: v7x
topology: tpu7x:2x2x1
jax: 0.10.0
libtpu: 0.0.40
codegen_flags: <defaults>
</compile_context>

<pallas_src>
import functools

import jax
import jax.numpy as jnp
from jax import lax
from jax.experimental import pallas as pl
from jax.experimental.pallas import tpu as pltpu

HIDDEN = 64
FUSED = 2 * HIDDEN           # 128: actor half | critic half
_NEG = -1e30                 # finite "minus-infinity": exp -> 0, 0 * _NEG == 0


def _round_up(x, m):
    return (x + m - 1) // m * m


def _cdiv(a, b):
    return -(-a // b)


def _bf16_transcendentals_supported():
    """v6e / v7x have bf16 EUP/VPU paths; v5e and older do not."""
    try:
        kind = jax.devices()[0].device_kind.lower()
    except Exception:
        return False
    return not any(v in kind for v in ("v2", "v3", "v4", "v5"))


def _choose_tiling(B, tile_b):
    """(tb, padded_B, n_tiles): tb multiple of 16, derived from B so padding
    stays under one bf16 sublane group per tile; even tile count when tiled
    (the "parallel" grid axis shards across v7x's two TensorCores)."""
    n_tiles = max(1, _cdiv(B, tile_b))
    if n_tiles > 1 and n_tiles % 2:
        n_tiles += 1
    tb = _round_up(_cdiv(B, n_tiles), 16)
    return tb, tb * n_tiles, n_tiles


def actor_critic_kernel(apply_softmax, action_dim, tanh_in_bf16,
                        x_ref, w1_ref, b1_ref, w2_ref, b2_ref, w3_ref, b3_ref,
                        out_ref):
    """Fused actor|critic MLP tile: 3 x 128-wide matmuls + softmax/entropy."""
    act_dt = jnp.bfloat16 if tanh_in_bf16 else jnp.float32

    x = x_ref[...]                                       # already bf16
    h = jnp.dot(x, w1_ref[...], preferred_element_type=jnp.float32) + b1_ref[...]
    h = jnp.tanh(h.astype(act_dt)).astype(jnp.bfloat16)
    h = jnp.dot(h, w2_ref[...], preferred_element_type=jnp.float32) + b2_ref[...]
    h = jnp.tanh(h.astype(act_dt)).astype(jnp.bfloat16)
    y = jnp.dot(h, w3_ref[...], preferred_element_type=jnp.float32) + b3_ref[...]
    # y: (tile_b, OUT_PAD) f32. Cols [0:A] actor logits, col A critic value,
    # cols >= A+1 hold the baked -1e30 softmax mask (discrete) or zeros.

    if not apply_softmax:
        # Continuous action space: actor output is the action mean; entropy
        # column stays 0 (MVN entropy depends only on action_var -> glue).
        out_ref[...] = y.astype(out_ref.dtype)
    else:
        a = action_dim
        col = lax.broadcasted_iota(jnp.int32, y.shape, 1)
        is_val = col == a
        # Entropy/padding columns already carry -1e30 from b3; only the value
        # column needs masking here.
        zm = jnp.where(is_val, _NEG, y)
        m = jnp.max(zm, axis=-1, keepdims=True)
        z = zm - m
        e = jnp.exp(z)                                   # masked cols -> 0
        denom = jnp.sum(e, axis=-1, keepdims=True)
        probs = e * pl.reciprocal(denom, approx=False)   # exact normalization
        # H = log(S) - sum_i p_i * z_i ; masked cols contribute exactly 0.
        entropy = jnp.log(denom) - jnp.sum(probs * z, axis=-1, keepdims=True)

        out = jnp.where(is_val, y, jnp.where(col == a + 1, entropy, probs))
        out_ref[...] = out.astype(out_ref.dtype)


def pack_params(params, action_dim, *, discrete=True):
    """One-time packing of the 12 PyTorch-style tensors into 3 fused layers."""
    (aw1, ab1, aw2, ab2, aw3, ab3,
     cw1, cb1, cw2, cb2, cw3, cb3) = params
    a = action_dim
    out_pad = _round_up(a + 2, 128)

    w1 = jnp.concatenate([aw1, cw1], axis=1)             # (S, 128)
    b1 = jnp.concatenate([ab1, cb1], axis=1)             # (1, 128)

    w2 = jnp.zeros((FUSED, FUSED), jnp.float32)
    w2 = w2.at[:HIDDEN, :HIDDEN].set(aw2).at[HIDDEN:, HIDDEN:].set(cw2)
    b2 = jnp.concatenate([ab2, cb2], axis=1)              # (1, 128)

    w3 = jnp.zeros((FUSED, out_pad), jnp.float32)
    w3 = w3.at[:HIDDEN, :a].set(aw3)
    w3 = w3.at[HIDDEN:, a:a + 1].set(cw3)
    b3 = jnp.zeros((1, out_pad), jnp.float32)
    b3 = b3.at[:, :a].set(ab3).at[:, a:a + 1].set(cb3)
    if discrete:
        # Bake the softmax mask for entropy + padding columns into the bias
        # (their w3 columns are exactly zero), saving in-kernel select passes.
        b3 = b3.at[:, a + 1:].set(_NEG)

    return (w1.astype(jnp.bfloat16), b1,
            w2.astype(jnp.bfloat16), b2,
            w3.astype(jnp.bfloat16), b3)


def actor_critic_forward(state, packed_params, action_dim, *,
                         has_continuous_action_space, tile_b=2048,
                         tanh_in_bf16=None):
    """Returns the packed bf16 slab (b_pad, OUT_PAD):
         cols [0:A]  actor probs (discrete) or action mean (continuous)
         col  A      critic value
         col  A+1    categorical entropy (0 for continuous)
    The packed slab is returned (not sliced) to avoid a second full HBM pass;
    use split_slab() or consume the slab directly downstream."""
    w1, b1, w2, b2, w3, b3 = packed_params
    B, S = state.shape
    out_pad = w3.shape[1]
    if tanh_in_bf16 is None:
        tanh_in_bf16 = _bf16_transcendentals_supported()

    tb, b_pad, n_tiles = _choose_tiling(B, tile_b)
    x = state.astype(jnp.bfloat16)        # cast once: halves input HBM stream
    if b_pad != B:
        x = jnp.pad(x, ((0, b_pad - B), (0, 0)))

    kernel = functools.partial(actor_critic_kernel,
                               not has_continuous_action_space, action_dim,
                               tanh_in_bf16)
    const2 = lambda i: (0, 0)

    slab = pl.pallas_call(
        kernel,
        out_shape=jax.ShapeDtypeStruct((b_pad, out_pad), jnp.bfloat16),
        grid_spec=pltpu.PrefetchScalarGridSpec(
            num_scalar_prefetch=0,
            grid=(n_tiles,),
            in_specs=[
                pl.BlockSpec((tb, S), lambda i: (i, 0)),   # states (tiled)
                pl.BlockSpec(w1.shape, const2),            # resident weights
                pl.BlockSpec(b1.shape, const2),
                pl.BlockSpec(w2.shape, const2),
                pl.BlockSpec(b2.shape, const2),
                pl.BlockSpec(w3.shape, const2),
                pl.BlockSpec(b3.shape, const2),
            ],
            out_specs=pl.BlockSpec((tb, out_pad), lambda i: (i, 0)),
        ),
        compiler_params=pltpu.CompilerParams(
            dimension_semantics=("parallel",)),
    )(x, w1, b1, w2, b2, w3, b3)
    return slab


def split_slab(slab, batch, action_dim):
    # Consumption-time split (tests / simple consumers). Production PPO code
    # should gather log-probs / read value directly from the packed slab.
    a = action_dim
    return (slab[:batch, :a],
            slab[:batch, a:a + 1],
            slab[:batch, a + 1:a + 2])


# ------------------------- init + pure-JAX reference -------------------------

def init_linear(key, in_features, out_features):
    # PyTorch nn.Linear default: U(-1/sqrt(fan_in), 1/sqrt(fan_in)).
    kw, kb = jax.random.split(key)
    bound = 1.0 / jnp.sqrt(jnp.float32(in_features))
    # Stored as (in, out): transposed vs. PyTorch's (out, in).
    w = jax.random.uniform(kw, (in_features, out_features), jnp.float32,
                           -bound, bound)
    b = jax.random.uniform(kb, (1, out_features), jnp.float32, -bound, bound)
    return w, b


def init_params(key, state_dim, action_dim):
    keys = jax.random.split(key, 6)
    aw1, ab1 = init_linear(keys[0], state_dim, HIDDEN)
    aw2, ab2 = init_linear(keys[1], HIDDEN, HIDDEN)
    aw3, ab3 = init_linear(keys[2], HIDDEN, action_dim)
    cw1, cb1 = init_linear(keys[3], state_dim, HIDDEN)
    cw2, cb2 = init_linear(keys[4], HIDDEN, HIDDEN)
    cw3, cb3 = init_linear(keys[5], HIDDEN, 1)
    return (aw1, ab1, aw2, ab2, aw3, ab3, cw1, cb1, cw2, cb2, cw3, cb3)


def reference_forward(state, params, *, has_continuous_action_space,
                      tanh_in_bf16):
    # Mirrors the kernel's precision policy: bf16 matmul inputs, f32
    # accumulation, tanh in bf16 on chips with bf16 EUP (f32 otherwise).
    (aw1, ab1, aw2, ab2, aw3, ab3,
     cw1, cb1, cw2, cb2, cw3, cb3) = params
    act_dt = jnp.bfloat16 if tanh_in_bf16 else jnp.float32

    def bdot(a, w):
        return jnp.dot(a.astype(jnp.bfloat16), w.astype(jnp.bfloat16),
                       preferred_element_type=jnp.float32)

    def hidden(x, w1, b1, w2, b2):
        h = jnp.tanh((bdot(x, w1) + b1).astype(act_dt)).astype(jnp.float32)
        h = jnp.tanh((bdot(h, w2) + b2).astype(act_dt)).astype(jnp.float32)
        return h

    ha = hidden(state, aw1, ab1, aw2, ab2)
    logits = bdot(ha, aw3) + ab3
    if has_continuous_action_space:
        actor_out = logits
        entropy = jnp.zeros((state.shape[0], 1), jnp.float32)
    else:
        actor_out = jax.nn.softmax(logits, axis=-1)
        logp = jax.nn.log_softmax(logits, axis=-1)
        entropy = -jnp.sum(actor_out * logp, axis=-1, keepdims=True)
    hc = hidden(state, cw1, cb1, cw2, cb2)
    values = bdot(hc, cw3) + cb3
    return actor_out, values, entropy


if __name__ == "__main__":
    # TODO(synk): Categorical/MultivariateNormal sampling, gather-based
    # log_prob(action), and MVN entropy (continuous case) from act()/evaluate()
    # are left to plain JAX glue; the kernel covers the fused actor/critic MLP
    # + softmax + entropy hot path.
    B, STATE_DIM, ACTION_DIM = 8, 16, 4

    key = jax.random.PRNGKey(0)
    k_params, k_state = jax.random.split(key)
    params = init_params(k_params, STATE_DIM, ACTION_DIM)
    state = jax.random.normal(k_state, (B, STATE_DIM), jnp.float32)

    tanh_bf16 = _bf16_transcendentals_supported()
    # bf16 output slab + (on v6e/v7x) bf16 tanh: allow a little extra slack
    # beyond the matched-precision reference when the bf16 tanh path is on.
    tol = 5e-3 if tanh_bf16 else 2e-3

    ok = True
    for continuous in (False, True):
        packed = pack_params(params, ACTION_DIM, discrete=not continuous)
        slab = actor_critic_forward(
            state, packed, ACTION_DIM,
            has_continuous_action_space=continuous, tanh_in_bf16=tanh_bf16)
        slab = jax.block_until_ready(slab)
        actor_out, values, entropy = split_slab(slab, B, ACTION_DIM)

        ref_actor, ref_values, ref_entropy = reference_forward(
            state, params, has_continuous_action_space=continuous,
            tanh_in_bf16=tanh_bf16)

        ok &= bool(jnp.allclose(actor_out, ref_actor, atol=tol, rtol=tol))
        ok &= bool(jnp.allclose(values, ref_values, atol=tol, rtol=tol))
        ok &= bool(jnp.allclose(entropy, ref_entropy, atol=tol, rtol=tol))

    assert ok, "Pallas ActorCritic kernel mismatch vs JAX reference"
    print("KERNEL_OK")
</pallas_src>

<mosaic_0001>
module attributes {stable_mosaic.version = 11 : i64} {
  func.func @actor_critic_kernel(%arg0: i32, %arg1: memref<16x16xbf16, #tpu.memory_space<vmem>>, %arg2: memref<16x128xbf16, #tpu.memory_space<vmem>>, %arg3: memref<1x128xf32, #tpu.memory_space<vmem>>, %arg4: memref<128x128xbf16, #tpu.memory_space<vmem>>, %arg5: memref<1x128xf32, #tpu.memory_space<vmem>>, %arg6: memref<128x128xbf16, #tpu.memory_space<vmem>>, %arg7: memref<1x128xf32, #tpu.memory_space<vmem>>, %arg8: memref<16x128xbf16, #tpu.memory_space<vmem>>) attributes {dimension_semantics = [#tpu.dimension_semantics<parallel>], iteration_bounds = array<i64: 1>, scalar_prefetch = 0 : i64, scratch_operands = 0 : i64, tpu.core_type = #tpu.core_type<tc>, window_params = [{transform_indices = @transform_0, window_bounds = array<i64: 16, 16>}, {pipeline_mode = #tpu.pipeline_mode<synchronous>, transform_indices = @transform_1, window_bounds = array<i64: 16, 128>}, {pipeline_mode = #tpu.pipeline_mode<synchronous>, transform_indices = @transform_2, window_bounds = array<i64: 1, 128>}, {pipeline_mode = #tpu.pipeline_mode<synchronous>, transform_indices = @transform_3, window_bounds = array<i64: 128, 128>}, {pipeline_mode = #tpu.pipeline_mode<synchronous>, transform_indices = @transform_4, window_bounds = array<i64: 1, 128>}, {pipeline_mode = #tpu.pipeline_mode<synchronous>, transform_indices = @transform_5, window_bounds = array<i64: 128, 128>}, {pipeline_mode = #tpu.pipeline_mode<synchronous>, transform_indices = @transform_6, window_bounds = array<i64: 1, 128>}, {transform_indices = @transform_7, window_bounds = array<i64: 16, 128>}]} {
    %c0 = arith.constant 0 : index
    %c0_0 = arith.constant 0 : index
    %0 = vector.load %arg1[%c0, %c0_0] : memref<16x16xbf16, #tpu.memory_space<vmem>>, vector<16x16xbf16>
    %c0_1 = arith.constant 0 : index
    %c0_2 = arith.constant 0 : index
    %1 = vector.load %arg2[%c0_1, %c0_2] : memref<16x128xbf16, #tpu.memory_space<vmem>>, vector<16x128xbf16>
    %cst = arith.constant dense<0.000000e+00> : vector<16x128xf32>
    %2 = tpu.matmul %0, %1, %cst {dimension_numbers = #tpu.dot_dimension_numbers<[1], [0], [0], [1], [0, 0, 1, 1], [], []>} : vector<16x16xbf16>, vector<16x128xbf16>, vector<16x128xf32> -> vector<16x128xf32>
    %c0_3 = arith.constant 0 : index
    %c0_4 = arith.constant 0 : index
    %3 = vector.load %arg3[%c0_3, %c0_4] : memref<1x128xf32, #tpu.memory_space<vmem>>, vector<1x128xf32>
    %4 = vector.broadcast %3 : vector<1x128xf32> to vector<16x128xf32>
    %5 = arith.addf %2, %4 : vector<16x128xf32>
    %6 = arith.truncf %5 : vector<16x128xf32> to vector<16x128xbf16>
    %7 = math.tanh %6 : vector<16x128xbf16>
    %c0_5 = arith.constant 0 : index
    %c0_6 = arith.constant 0 : index
    %8 = vector.load %arg4[%c0_5, %c0_6] : memref<128x128xbf16, #tpu.memory_space<vmem>>, vector<128x128xbf16>
    %cst_7 = arith.constant dense<0.000000e+00> : vector<16x128xf32>
    %9 = tpu.matmul %7, %8, %cst_7 {dimension_numbers = #tpu.dot_dimension_numbers<[1], [0], [0], [1], [0, 0, 1, 1], [], []>} : vector<16x128xbf16>, vector<128x128xbf16>, vector<16x128xf32> -> vector<16x128xf32>
    %c0_8 = arith.constant 0 : index
    %c0_9 = arith.constant 0 : index
    %10 = vector.load %arg5[%c0_8, %c0_9] : memref<1x128xf32, #tpu.memory_space<vmem>>, vector<1x128xf32>
    %11 = vector.broadcast %10 : vector<1x128xf32> to vector<16x128xf32>
    %12 = arith.addf %9, %11 : vector<16x128xf32>
    %13 = arith.truncf %12 : vector<16x128xf32> to vector<16x128xbf16>
    %14 = math.tanh %13 : vector<16x128xbf16>
    %c0_10 = arith.constant 0 : index
    %c0_11 = arith.constant 0 : index
    %15 = vector.load %arg6[%c0_10, %c0_11] : memref<128x128xbf16, #tpu.memory_space<vmem>>, vector<128x128xbf16>
    %cst_12 = arith.constant dense<0.000000e+00> : vector<16x128xf32>
    %16 = tpu.matmul %14, %15, %cst_12 {dimension_numbers = #tpu.dot_dimension_numbers<[1], [0], [0], [1], [0, 0, 1, 1], [], []>} : vector<16x128xbf16>, vector<128x128xbf16>, vector<16x128xf32> -> vector<16x128xf32>
    %c0_13 = arith.constant 0 : index
    %c0_14 = arith.constant 0 : index
    %17 = vector.load %arg7[%c0_13, %c0_14] : memref<1x128xf32, #tpu.memory_space<vmem>>, vector<1x128xf32>
    %18 = vector.broadcast %17 : vector<1x128xf32> to vector<16x128xf32>
    %19 = arith.addf %16, %18 : vector<16x128xf32>
    %20 = tpu.iota {dimensions = array<i32: 1>} : vector<16x128xi32>
    %c4_i32 = arith.constant 4 : i32
    %21 = vector.broadcast %c4_i32 : i32 to vector<16x128xi32>
    %22 = arith.cmpi eq, %20, %21 : vector<16x128xi32>
    %cst_15 = arith.constant -1.000000e+30 : f32
    %23 = vector.broadcast %cst_15 : f32 to vector<16x128xf32>
    %24 = arith.select %22, %23, %19 : vector<16x128xi1>, vector<16x128xf32>
    %cst_16 = arith.constant dense<0xFF800000> : vector<16xf32>
    %25 = vector.multi_reduction <maximumf>, %24, %cst_16 [1] : vector<16x128xf32> to vector<16xf32>
    %26 = vector.shape_cast %25 : vector<16xf32> to vector<16x1xf32>
    %27 = vector.broadcast %26 : vector<16x1xf32> to vector<16x128xf32>
    %28 = arith.subf %24, %27 : vector<16x128xf32>
    %29 = math.exp %28 : vector<16x128xf32>
    %cst_17 = arith.constant dense<0.000000e+00> : vector<16xf32>
    %30 = vector.multi_reduction <add>, %29, %cst_17 [1] : vector<16x128xf32> to vector<16xf32>
    %31 = vector.shape_cast %30 : vector<16xf32> to vector<16x1xf32>
    %32 = tpu.reciprocal %31 : vector<16x1xf32> -> vector<16x1xf32>
    %33 = vector.broadcast %32 : vector<16x1xf32> to vector<16x128xf32>
    %34 = arith.mulf %29, %33 : vector<16x128xf32>
    %35 = math.log %31 : vector<16x1xf32>
    %36 = arith.mulf %34, %28 : vector<16x128xf32>
    %cst_18 = arith.constant dense<0.000000e+00> : vector<16xf32>
    %37 = vector.multi_reduction <add>, %36, %cst_18 [1] : vector<16x128xf32> to vector<16xf32>
    %38 = vector.shape_cast %37 : vector<16xf32> to vector<16x1xf32>
    %39 = arith.subf %35, %38 : vector<16x1xf32>
    %c5_i32 = arith.constant 5 : i32
    %40 = vector.broadcast %c5_i32 : i32 to vector<16x128xi32>
    %41 = arith.cmpi eq, %20, %40 : vector<16x128xi32>
    %42 = vector.shape_cast %39 : vector<16x1xf32> to vector<16x1xf32>
    %43 = vector.broadcast %42 : vector<16x1xf32> to vector<16x128xf32>
    %44 = arith.select %41, %43, %34 : vector<16x128xi1>, vector<16x128xf32>
    %45 = arith.select %22, %19, %44 : vector<16x128xi1>, vector<16x128xf32>
    %46 = arith.truncf %45 : vector<16x128xf32> to vector<16x128xbf16>
    %c0_19 = arith.constant 0 : index
    %c0_20 = arith.constant 0 : index
    %47 = vector.load %arg8[%c0_19, %c0_20] : memref<16x128xbf16, #tpu.memory_space<vmem>>, vector<16x128xbf16>
    tpu.vector_store %arg8[%c0_19, %c0_20], %46 {strides = array<i32>} : memref<16x128xbf16, #tpu.memory_space<vmem>>, vector<16x128xbf16>,
    return
  }
  func.func @transform_0(%arg0: i32) -> (i32, i32) {
    %c0_i32 = arith.constant 0 : i32
    %c0_i32_0 = arith.constant 0 : i32
    return %arg0, %c0_i32 : i32, i32
  }
  func.func @transform_1(%arg0: i32) -> (i32, i32) {
    %c0_i32 = arith.constant 0 : i32
    %c0_i32_0 = arith.constant 0 : i32
    %c0_i32_1 = arith.constant 0 : i32
    return %c0_i32, %c0_i32_0 : i32, i32
  }
  func.func @transform_2(%arg0: i32) -> (i32, i32) {
    %c0_i32 = arith.constant 0 : i32
    %c0_i32_0 = arith.constant 0 : i32
    %c0_i32_1 = arith.constant 0 : i32
    return %c0_i32, %c0_i32_0 : i32, i32
  }
  func.func @transform_3(%arg0: i32) -> (i32, i32) {
    %c0_i32 = arith.constant 0 : i32
    %c0_i32_0 = arith.constant 0 : i32
    %c0_i32_1 = arith.constant 0 : i32
    return %c0_i32, %c0_i32_0 : i32, i32
  }
  func.func @transform_4(%arg0: i32) -> (i32, i32) {
    %c0_i32 = arith.constant 0 : i32
    %c0_i32_0 = arith.constant 0 : i32
    %c0_i32_1 = arith.constant 0 : i32
    return %c0_i32, %c0_i32_0 : i32, i32
  }
  func.func @transform_5(%arg0: i32) -> (i32, i32) {
    %c0_i32 = arith.constant 0 : i32
    %c0_i32_0 = arith.constant 0 : i32
    %c0_i32_1 = arith.constant 0 : i32
    return %c0_i32, %c0_i32_0 : i32, i32
  }
  func.func @transform_6(%arg0: i32) -> (i32, i32) {
    %c0_i32 = arith.constant 0 : i32
    %c0_i32_0 = arith.constant 0 : i32
    %c0_i32_1 = arith.constant 0 : i32
    return %c0_i32, %c0_i32_0 : i32, i32
  }
  func.func @transform_7(%arg0: i32) -> (i32, i32) {
    %c0_i32 = arith.constant 0 : i32
    %c0_i32_0 = arith.constant 0 : i32
    return %arg0, %c0_i32 : i32, i32
  }
}

</mosaic_0001>

<llo_original>
// kernel: tpu_custom_call.1
$region0: #{tpu_custom_call.1}
  #allocation0 [shape = 'u32[]', space=smem, size = 0x4, offset = 0x4, fixed_abs, tag = 'smem constant byte address 0x4 - core index']
  #allocation1 [shape = 'u32[144,128]{1,0:T(1,128)}', space=vmem, size = 0x12000, scoped, tag = 'internal scratch']
  %s0 = inlined_call_operand.hbm [shape: bf16[16,16], index: 0, kind: input, shape index: {}]
  %s1 = inlined_call_operand.hbm [shape: bf16[16,128], index: 1, kind: input, shape index: {}]
  %s2 = inlined_call_operand.vmem [shape: f32[1,128], index: 2, kind: input, shape index: {}]
  %s3 = inlined_call_operand.hbm [shape: bf16[128,128], index: 3, kind: input, shape index: {}]
  %s4 = inlined_call_operand.vmem [shape: f32[1,128], index: 4, kind: input, shape index: {}]
  %s5 = inlined_call_operand.hbm [shape: bf16[128,128], index: 5, kind: input, shape index: {}]
  %s6 = inlined_call_operand.vmem [shape: f32[1,128], index: 6, kind: input, shape index: {}]
  %s7 = inlined_call_operand.hbm [shape: bf16[16,128], index: 7, kind: output, shape index: {}]
  %s8 = sld [smem:[#allocation0]]
  $region54: #{tpu_custom_call.1} parent=0
    _
  %s10 = ssub.s32 1, %s8
  %s11 = scalar_select 0, %s10, %s8
  $region1: #{tpu_custom_call.1} parent=0
    #allocation2 [shape = 'u8[4096]{0}', space=vmem, size = 0x1000, scoped, tag = 'input window, operand 0, single buffered']
    #allocation3 [shape = 's32[1]{0}', space=sflag, size = 0x4, scoped, tag = 'scoped memory for tpu_custom_call.1']
    #allocation4 [shape = 's32[1]{0}', space=sflag, size = 0x4, scoped, tag = 'scoped memory for tpu_custom_call.1']
    #allocation5 [shape = 'u8[4096]{0}', space=vmem, size = 0x1000, scoped, tag = 'input window, operand 1, single buffered']
    #allocation6 [shape = 's32[1]{0}', space=sflag, size = 0x4, scoped, tag = 'scoped memory for tpu_custom_call.1']
    #allocation7 [shape = 'u8[32768]{0}', space=vmem, size = 0x8000, scoped, tag = 'input window, operand 3, single buffered']
    #allocation8 [shape = 'u8[32768]{0}', space=vmem, size = 0x8000, scoped, tag = 'input window, operand 5, single buffered']
    #allocation9 [shape = 's32[1]{0}', space=sflag, size = 0x4, scoped, tag = 'scoped memory for tpu_custom_call.1']
    #allocation10 [shape = 'u8[4096]{0}', space=vmem, size = 0x1000, scoped, tag = 'output window, operand 0, single buffered']
    %12 = vsyncpa [#allocation3], 0
    %13 = vsyncpa [#allocation6], 0
    %14 = vsyncpa [#allocation9], 0
    %15 = vsyncpa [#allocation4], 0
    // Predicated region
    $region2: #{tpu_custom_call.1} parent=1 // pred_check
      _
    $region3: #{tpu_custom_call.1} parent=1 // pred_check_branch
      %17 = sbr.rel (0) target = $region5
    $region4: #{tpu_custom_call.1} parent=1 // pred_region
      %s19 = ssub.s32 128, 128
      %20 = vsyncadd [#allocation3], %s19
      %s21 = sshll.u32 [#allocation2], 4
      %s22 = int_to_ptr.vmem [resolvable:$true] %s21
      %27 = dma.hbm_to_vmem [thread:$0]  %s0, 128, %s22, [#allocation3], 64, 64, 4
    $region5: #{tpu_custom_call.1} parent=1 // pred_fallthru
      _
    // Predicated region
    $region6: #{tpu_custom_call.1} parent=1 // pred_check
      _
    $region7: #{tpu_custom_call.1} parent=1 // pred_check_branch
      %29 = sbr.rel (0) target = $region9
    $region8: #{tpu_custom_call.1} parent=1 // pred_region
      %s31 = ssub.s32 128, 128
      %32 = vsyncadd [#allocation6], %s31
      %s33 = sshll.u32 [#allocation5], 4
      %s34 = int_to_ptr.vmem [resolvable:$true] %s33
      %39 = dma.hbm_to_vmem [thread:$0]  %s1, 128, %s34, [#allocation6], 64, 64, 4
    $region9: #{tpu_custom_call.1} parent=1 // pred_fallthru
      _
    // Predicated region
    $region10: #{tpu_custom_call.1} parent=1 // pred_check
      _
    $region11: #{tpu_custom_call.1} parent=1 // pred_check_branch
      %41 = sbr.rel (0) target = $region13
    $region12: #{tpu_custom_call.1} parent=1 // pred_region
      _
    $region13: #{tpu_custom_call.1} parent=1 // pred_fallthru
      _
    // Predicated region
    $region14: #{tpu_custom_call.1} parent=1 // pred_check
      _
    $region15: #{tpu_custom_call.1} parent=1 // pred_check_branch
      %43 = sbr.rel (0) target = $region17
    $region16: #{tpu_custom_call.1} parent=1 // pred_region
      %s45 = ssub.s32 1024, 1024
      %46 = vsyncadd [#allocation6], %s45
      %s47 = sshll.u32 [#allocation7], 4
      %s48 = int_to_ptr.vmem [resolvable:$true] %s47
      %53 = dma.hbm_to_vmem [thread:$0]  %s3, 1024, %s48, [#allocation6], 64, 64, 4
    $region17: #{tpu_custom_call.1} parent=1 // pred_fallthru
      _
    // Predicated region
    $region18: #{tpu_custom_call.1} parent=1 // pred_check
      _
    $region19: #{tpu_custom_call.1} parent=1 // pred_check_branch
      %55 = sbr.rel (0) target = $region21
    $region20: #{tpu_custom_call.1} parent=1 // pred_region
      _
    $region21: #{tpu_custom_call.1} parent=1 // pred_fallthru
      _
    // Predicated region
    $region22: #{tpu_custom_call.1} parent=1 // pred_check
      _
    $region23: #{tpu_custom_call.1} parent=1 // pred_check_branch
      %57 = sbr.rel (0) target = $region25
    $region24: #{tpu_custom_call.1} parent=1 // pred_region
      %s59 = ssub.s32 1024, 1024
      %60 = vsyncadd [#allocation9], %s59
      %s61 = sshll.u32 [#allocation8], 4
      %s62 = int_to_ptr.vmem [resolvable:$true] %s61
      %67 = dma.hbm_to_vmem [thread:$0]  %s5, 1024, %s62, [#allocation9], 64, 64, 4
    $region25: #{tpu_custom_call.1} parent=1 // pred_fallthru
      _
    // Predicated region
    $region26: #{tpu_custom_call.1} parent=1 // pred_check
      _
    $region27: #{tpu_custom_call.1} parent=1 // pred_check_branch
      %69 = sbr.rel (0) target = $region29
    $region28: #{tpu_custom_call.1} parent=1 // pred_region
      _
    $region29: #{tpu_custom_call.1} parent=1 // pred_fallthru
      _
    // Predicated region
    $region30: #{tpu_custom_call.1} parent=1 // pred_check
      _
    $region31: #{tpu_custom_call.1} parent=1 // pred_check_branch
      %71 = sbr.rel (0) target = $region33
    $region32: #{tpu_custom_call.1} parent=1 // pred_region
      %72 = dma.done [#allocation3], 128
    $region33: #{tpu_custom_call.1} parent=1 // pred_fallthru
      _
    // Predicated region
    $region34: #{tpu_custom_call.1} parent=1 // pred_check
      _
    $region35: #{tpu_custom_call.1} parent=1 // pred_check_branch
      %74 = sbr.rel (0) target = $region37
    $region36: #{tpu_custom_call.1} parent=1 // pred_region
      %75 = dma.done [#allocation6], 128
    $region37: #{tpu_custom_call.1} parent=1 // pred_fallthru
      _
    // Predicated region
    $region38: #{tpu_custom_call.1} parent=1 // pred_check
      _
    $region39: #{tpu_custom_call.1} parent=1 // pred_check_branch
      %77 = sbr.rel (0) target = $region41
    $region40: #{tpu_custom_call.1} parent=1 // pred_region
      %78 = dma.done [#allocation6], 1024
    $region41: #{tpu_custom_call.1} parent=1 // pred_fallthru
      _
    // Predicated region
    $region42: #{tpu_custom_call.1} parent=1 // pred_check
      _
    $region43: #{tpu_custom_call.1} parent=1 // pred_check_branch
      %80 = sbr.rel (0) target = $region45
    $region44: #{tpu_custom_call.1} parent=1 // pred_region
      %81 = dma.done [#allocation9], 1024
    $region45: #{tpu_custom_call.1} parent=1 // pred_fallthru
      _
    %v83 = vld [vmem:[#allocation2] sm:$0xf]
    %v84 = vld [vmem:[#allocation2 + $0x4] sm:$0xf]
    %v85 = vld [vmem:[#allocation5] sm:$0xf]
    %v86 = vld [vmem:[#allocation5 + $0x4] sm:$0xf]
    %v87 = vld [vmem:[%s2] sm:$0x1]
    %v89 = vlaneseq
    %v90 = vshrl.u32 %v89, 7
    %v91 = vsub.s32 0, %v90
    %v92 = vrot.slane %v87, %v91
    %v96 = vunpack.c.l.b16 %v83
    %v97 = vunpack.c.l.b16 %v84
    %v98 = vpack.c.b16 %v97, %v96
    %v101 = vunpack.c.l.b16 %v85
    %v102 = vunpack.c.l.b16 %v86
    %v103 = vpack.c.b16 %v102, %v101
    %vm105 = vcmask 130048
    %v107 = vsel %vm105, %v98, 0
    %109 = vmatprep.subr.bf16.mxu0 0
    %110 = vmatpush1.bf16.msra.mxu0 %v103
    %111 = vmatprep.subr.bf16.mxu0 0
    %112 = vmatpush1.bf16.msra.mxu0 0
    %113 = vmatprep.subr.bf16.mxu0 0
    %114 = vmatpush1.bf16.msra.mxu0 0
    %115 = vmatprep.subr.bf16.mxu0 0
    %116 = vmatpush1.bf16.msra.mxu0 0
    %117 = vmatprep.subr.bf16.mxu0 0
    %118 = vmatpush1.bf16.msra.mxu0 0
    %119 = vmatprep.subr.bf16.mxu0 0
    %120 = vmatpush1.bf16.msra.mxu0 0
    %121 = vmatprep.subr.bf16.mxu0 0
    %122 = vmatpush1.bf16.msra.mxu0 0
    %123 = vmatprep.subr.bf16.mxu0 0
    %124 = vmatpush1.bf16.msra.mxu0 0
    %125 = vmatprep.subr.bf16.mxu0 0
    %126 = vmatpush1.bf16.msra.mxu0 0
    %127 = vmatprep.subr.bf16.mxu0 0
    %128 = vmatpush1.bf16.msra.mxu0 0
    %129 = vmatprep.subr.bf16.mxu0 0
    %130 = vmatpush1.bf16.msra.mxu0 0
    %131 = vmatprep.subr.bf16.mxu0 0
    %132 = vmatpush1.bf16.msra.mxu0 0
    %133 = vmatprep.subr.bf16.mxu0 0
    %134 = vmatpush1.bf16.msra.mxu0 0
    %135 = vmatprep.subr.bf16.mxu0 0
    %136 = vmatpush1.bf16.msra.mxu0 0
    %137 = vmatprep.subr.bf16.mxu0 0
    %138 = vmatpush1.bf16.msra.mxu0 0
    %139 = vmatprep.subr.bf16.mxu0 0
    %140 = vmatpush1.bf16.msra.mxu0 0
    %141 = vmatprep.mubr.bf16.mxu0 0
    %142 = vmatmul.mubr.bf16.gmra.mrb[0].mxu0 %v107
    %v143 = vpop.f32.mrb[0].mxu0
    %v144 = vadd.f32 %v92, %v143
    %v145 = vpop.f32.mrb[0].mxu0
    %v146 = vpop.f32.mrb[0].mxu0
    %v147 = vadd.f32 %v92, %v146
    %v148 = vpop.f32.mrb[0].mxu0
    %149 = vdwg.mxu0
    %v150 = vpack.c.bf16 %v147, %v144
    %v151 = vtanh.bf16.pop %v150
    %v152 = vld [vmem:[#allocation7] sm:$0xf]
    %v153 = vld [vmem:[#allocation7 + $0x4] sm:$0xf]
    %v154 = vld [vmem:[#allocation7 + $0x8] sm:$0xf]
    %v155 = vld [vmem:[#allocation7 + $0xc] sm:$0xf]
    %v156 = vld [vmem:[#allocation7 + $0x10] sm:$0xf]
    %v157 = vld [vmem:[#allocation7 + $0x14] sm:$0xf]
    %v158 = vld [vmem:[#allocation7 + $0x18] sm:$0xf]
    %v159 = vld [vmem:[#allocation7 + $0x1c] sm:$0xf]
    %v160 = vld [vmem:[#allocation7 + $0x20] sm:$0xf]
    %v161 = vld [vmem:[#allocation7 + $0x24] sm:$0xf]
    %v162 = vld [vmem:[#allocation7 + $0x28] sm:$0xf]
    %v163 = vld [vmem:[#allocation7 + $0x2c] sm:$0xf]
    %v164 = vld [vmem:[#allocation7 + $0x30] sm:$0xf]
    %v165 = vld [vmem:[#allocation7 + $0x34] sm:$0xf]
    %v166 = vld [vmem:[#allocation7 + $0x38] sm:$0xf]
    %v167 = vld [vmem:[#allocation7 + $0x3c] sm:$0xf]
    %v168 = vld [vmem:[%s4] sm:$0x1]
    %v170 = vlaneseq
    %v171 = vshrl.u32 %v170, 7
    %v172 = vsub.s32 0, %v171
    %v173 = vrot.slane %v168, %v172
    %v191 = vunpack.c.l.b16 %v152
    %v192 = vunpack.c.l.b16 %v153
    %v193 = vunpack.c.l.b16 %v154
    %v194 = vunpack.c.l.b16 %v155
    %v195 = vunpack.c.l.b16 %v156
    %v196 = vunpack.c.l.b16 %v157
    %v197 = vunpack.c.l.b16 %v158
    %v198 = vunpack.c.l.b16 %v159
    %v199 = vunpack.c.l.b16 %v160
    %v200 = vunpack.c.l.b16 %v161
    %v201 = vunpack.c.l.b16 %v162
    %v202 = vunpack.c.l.b16 %v163
    %v203 = vunpack.c.l.b16 %v164
    %v204 = vunpack.c.l.b16 %v165
    %v205 = vunpack.c.l.b16 %v166
    %v206 = vunpack.c.l.b16 %v167
    %v207 = vpack.c.b16 %v192, %v191
    %v208 = vpack.c.b16 %v194, %v193
    %v209 = vpack.c.b16 %v196, %v195
    %v210 = vpack.c.b16 %v198, %v197
    %v211 = vpack.c.b16 %v200, %v199
    %v212 = vpack.c.b16 %v202, %v201
    %v213 = vpack.c.b16 %v204, %v203
    %v214 = vpack.c.b16 %v206, %v205
    %223 = vmatprep.subr.bf16.mxu0 0
    %224 = vmatpush1.bf16.msra.mxu0 %v207
    %225 = vmatprep.subr.bf16.mxu0 0
    %226 = vmatpush1.bf16.msra.mxu0 %v208
    %227 = vmatprep.subr.bf16.mxu0 0
    %228 = vmatpush1.bf16.msra.mxu0 %v209
    %229 = vmatprep.subr.bf16.mxu0 0
    %230 = vmatpush1.bf16.msra.mxu0 %v210
    %231 = vmatprep.subr.bf16.mxu0 0
    %232 = vmatpush1.bf16.msra.mxu0 %v211
    %233 = vmatprep.subr.bf16.mxu0 0
    %234 = vmatpush1.bf16.msra.mxu0 %v212
    %235 = vmatprep.subr.bf16.mxu0 0
    %236 = vmatpush1.bf16.msra.mxu0 %v213
    %237 = vmatprep.subr.bf16.mxu0 0
    %238 = vmatpush1.bf16.msra.mxu0 %v214
    %239 = vmatprep.subr.bf16.mxu0 0
    %240 = vmatpush1.bf16.msra.mxu0 0
    %241 = vmatprep.subr.bf16.mxu0 0
    %242 = vmatpush1.bf16.msra.mxu0 0
    %243 = vmatprep.subr.bf16.mxu0 0
    %244 = vmatpush1.bf16.msra.mxu0 0
    %245 = vmatprep.subr.bf16.mxu0 0
    %246 = vmatpush1.bf16.msra.mxu0 0
    %247 = vmatprep.subr.bf16.mxu0 0
    %248 = vmatpush1.bf16.msra.mxu0 0
    %249 = vmatprep.subr.bf16.mxu0 0
    %250 = vmatpush1.bf16.msra.mxu0 0
    %251 = vmatprep.subr.bf16.mxu0 0
    %252 = vmatpush1.bf16.msra.mxu0 0
    %253 = vmatprep.subr.bf16.mxu0 0
    %254 = vmatpush1.bf16.msra.mxu0 0
    %255 = vmatprep.mubr.bf16.mxu0 0
    %256 = vmatmul.mubr.bf16.gmra.mrb[0].mxu0 %v151
    %v257 = vpop.f32.mrb[0].mxu0
    %v258 = vadd.f32 %v173, %v257
    %v259 = vpop.f32.mrb[0].mxu0
    %v260 = vpop.f32.mrb[0].mxu0
    %v261 = vadd.f32 %v173, %v260
    %v262 = vpop.f32.mrb[0].mxu0
    %263 = vdwg.mxu0
    %v264 = vpack.c.bf16 %v261, %v258
    %v265 = vtanh.bf16.pop %v264
    %v266 = vld [vmem:[#allocation8] sm:$0xf]
    %v267 = vld [vmem:[#allocation8 + $0x4] sm:$0xf]
    %v268 = vld [vmem:[#allocation8 + $0x8] sm:$0xf]
    %v269 = vld [vmem:[#allocation8 + $0xc] sm:$0xf]
    %v270 = vld [vmem:[#allocation8 + $0x10] sm:$0xf]
    %v271 = vld [vmem:[#allocation8 + $0x14] sm:$0xf]
    %v272 = vld [vmem:[#allocation8 + $0x18] sm:$0xf]
    %v273 = vld [vmem:[#allocation8 + $0x1c] sm:$0xf]
    %v274 = vld [vmem:[#allocation8 + $0x20] sm:$0xf]
    %v275 = vld [vmem:[#allocation8 + $0x24] sm:$0xf]
    %v276 = vld [vmem:[#allocation8 + $0x28] sm:$0xf]
    %v277 = vld [vmem:[#allocation8 + $0x2c] sm:$0xf]
    %v278 = vld [vmem:[#allocation8 + $0x30] sm:$0xf]
    %v279 = vld [vmem:[#allocation8 + $0x34] sm:$0xf]
    %v280 = vld [vmem:[#allocation8 + $0x38] sm:$0xf]
    %v281 = vld [vmem:[#allocation8 + $0x3c] sm:$0xf]
    %v282 = vld [vmem:[%s6] sm:$0x1]
    %v284 = vlaneseq
    %v285 = vshrl.u32 %v284, 7
    %v286 = vsub.s32 0, %v285
    %v287 = vrot.slane %v282, %v286
    %v305 = vunpack.c.l.b16 %v266
    %v306 = vunpack.c.l.b16 %v267
    %v307 = vunpack.c.l.b16 %v268
    %v308 = vunpack.c.l.b16 %v269
    %v309 = vunpack.c.l.b16 %v270
    %v310 = vunpack.c.l.b16 %v271
    %v311 = vunpack.c.l.b16 %v272
    %v312 = vunpack.c.l.b16 %v273
    %v313 = vunpack.c.l.b16 %v274
    %v314 = vunpack.c.l.b16 %v275
    %v315 = vunpack.c.l.b16 %v276
    %v316 = vunpack.c.l.b16 %v277
    %v317 = vunpack.c.l.b16 %v278
    %v318 = vunpack.c.l.b16 %v279
    %v319 = vunpack.c.l.b16 %v280
    %v320 = vunpack.c.l.b16 %v281
    %v321 = vpack.c.b16 %v306, %v305
    %v322 = vpack.c.b16 %v308, %v307
    %v323 = vpack.c.b16 %v310, %v309
    %v324 = vpack.c.b16 %v312, %v311
    %v325 = vpack.c.b16 %v314, %v313
    %v326 = vpack.c.b16 %v316, %v315
    %v327 = vpack.c.b16 %v318, %v317
    %v328 = vpack.c.b16 %v320, %v319
    %337 = vmatprep.subr.bf16.mxu0 0
    %338 = vmatpush1.bf16.msra.mxu0 %v321
    %339 = vmatprep.subr.bf16.mxu0 0
    %340 = vmatpush1.bf16.msra.mxu0 %v322
    %341 = vmatprep.subr.bf16.mxu0 0
    %342 = vmatpush1.bf16.msra.mxu0 %v323
    %343 = vmatprep.subr.bf16.mxu0 0
    %344 = vmatpush1.bf16.msra.mxu0 %v324
    %345 = vmatprep.subr.bf16.mxu0 0
    %346 = vmatpush1.bf16.msra.mxu0 %v325
    %347 = vmatprep.subr.bf16.mxu0 0
    %348 = vmatpush1.bf16.msra.mxu0 %v326
    %349 = vmatprep.subr.bf16.mxu0 0
    %350 = vmatpush1.bf16.msra.mxu0 %v327
    %351 = vmatprep.subr.bf16.mxu0 0
    %352 = vmatpush1.bf16.msra.mxu0 %v328
    %353 = vmatprep.subr.bf16.mxu0 0
    %354 = vmatpush1.bf16.msra.mxu0 0
    %355 = vmatprep.subr.bf16.mxu0 0
    %356 = vmatpush1.bf16.msra.mxu0 0
    %357 = vmatprep.subr.bf16.mxu0 0
    %358 = vmatpush1.bf16.msra.mxu0 0
    %359 = vmatprep.subr.bf16.mxu0 0
    %360 = vmatpush1.bf16.msra.mxu0 0
    %361 = vmatprep.subr.bf16.mxu0 0
    %362 = vmatpush1.bf16.msra.mxu0 0
    %363 = vmatprep.subr.bf16.mxu0 0
    %364 = vmatpush1.bf16.msra.mxu0 0
    %365 = vmatprep.subr.bf16.mxu0 0
    %366 = vmatpush1.bf16.msra.mxu0 0
    %367 = vmatprep.subr.bf16.mxu0 0
    %368 = vmatpush1.bf16.msra.mxu0 0
    %369 = vmatprep.mubr.bf16.mxu0 0
    %370 = vmatmul.mubr.bf16.gmra.mrb[0].mxu0 %v265
    %v371 = vpop.f32.mrb[0].mxu0
    %v372 = vadd.f32 %v287, %v371
    %v373 = vpop.f32.mrb[0].mxu0
    %v374 = vpop.f32.mrb[0].mxu0
    %v375 = vadd.f32 %v287, %v374
    %v376 = vpop.f32.mrb[0].mxu0
    %377 = vdwg.mxu0
    %v378 = vlaneseq
    %v379 = vand.u32 %v378, 127
    %vm380 = vcmp.eq.s32.totalorder %v379, 4
    %v381 = vsel %vm380, -1e+30, %v372
    %v382 = vsel %vm380, -1e+30, %v375
    %383 = vmax.xlane.f32.xlu0 %v381
    %v384 = vpop.xlane.xlu0 %383
    %385 = vmax.xlane.f32.xlu0 %v382
    %v386 = vpop.xlane.xlu0 %385
    %v387 = vsub.f32 %v381, %v384
    %v388 = vsub.f32 %v382, %v386
    %v389 = vmul.f32 %v387, 1.442695
    %v390 = vpow.pop %v389
    %v391 = vmul.f32 %v388, 1.442695
    %v392 = vpow.pop %v391
    %393 = vadd.xlane.f32.xlu0 %v390
    %v394 = vpop.xlane.xlu0 %393
    %395 = vadd.xlane.f32.xlu0 %v392
    %v396 = vpop.xlane.xlu0 %395
    %v397 = vrcp.pop %v394
    %v398 = vrcp.pop %v396
    %v399 = vmul.f32 %v390, %v397
    %v400 = vmul.f32 %v392, %v398
    %v401 = vlog2.pop %v394
    %v402 = vmul.f32 %v401, 0.6931472
    %v403 = vlog2.pop %v396
    %v404 = vmul.f32 %v403, 0.6931472
    %v405 = vmul.f32 %v399, %v387
    %v406 = vmul.f32 %v400, %v388
    %407 = vadd.xlane.f32.xlu0 %v405
    %v408 = vpop.xlane.xlu0 %407
    %409 = vadd.xlane.f32.xlu0 %v406
    %v410 = vpop.xlane.xlu0 %409
    %v411 = vsub.f32 %v402, %v408
    %v412 = vsub.f32 %v404, %v410
    %vm413 = vcmp.eq.s32.totalorder %v379, 5
    %v414 = vsel %vm413, %v411, %v399
    %v415 = vsel %vm413, %v412, %v400
    %v416 = vsel %vm380, %v372, %v414
    %v417 = vsel %vm380, %v375, %v415
    %v418 = vpack.c.bf16 %v417, %v416
    %v420 = vunpack.c.l.b16 %v418
    %v421 = vunpack.c.h.b16 %v418
    %v422 = vpack.c.b16 %v420, %v420
    %v423 = vpack.c.b16 %v421, %v421
    %426 = vst [vmem:[#allocation10] sm:$0xf] %v422
    %427 = vst [vmem:[#allocation10 + $0x4] sm:$0xf] %v423
    // Predicated region
    $region46: #{tpu_custom_call.1} parent=1 // pred_check
      _
    $region47: #{tpu_custom_call.1} parent=1 // pred_check_branch
      %429 = sbr.rel (0) target = $region49
    $region48: #{tpu_custom_call.1} parent=1 // pred_region
      %s431 = ssub.s32 128, 128
      %432 = vsyncadd [#allocation4], %s431
      %s433 = sshll.u32 [#allocation10], 4
      %s434 = int_to_ptr.vmem [resolvable:$true] %s433
      %439 = dma.vmem_to_hbm [thread:$0]  %s434, 128, %s7, [#allocation4], 64, 64, 4
    $region49: #{tpu_custom_call.1} parent=1 // pred_fallthru
      _
    // Predicated region
    $region50: #{tpu_custom_call.1} parent=1 // pred_check
      _
    $region51: #{tpu_custom_call.1} parent=1 // pred_check_branch
      %441 = sbr.rel (0) target = $region53
    $region52: #{tpu_custom_call.1} parent=1 // pred_region
      %442 = dma.done [#allocation4], 128
    $region53: #{tpu_custom_call.1} parent=1 // pred_fallthru
      _
    %443 = vsyncpa [#allocation3], 1
    %444 = vsyncpa [#allocation6], 1
    %445 = vsyncpa [#allocation9], 1
    %446 = vsyncpa [#allocation4], 1

</llo_original>
